<compile_context>
chip_gen: v5e
topology: v5e:2x2
jax: 0.10.0
libtpu: 0.0.40
codegen_flags: <defaults>
</compile_context>

<pallas_src>
import functools

import jax
import jax.numpy as jnp
from jax import lax
from jax.experimental import pallas as pl
from jax.experimental.pallas import tpu as pltpu


def _round_up(x: int, m: int) -> int:
    return (x + m - 1) // m * m


def _cdiv(a: int, b: int) -> int:
    return -(-a // b)


def _physical_vmem_bytes() -> int:
    """Best-effort trace-time query of physical VMEM capacity."""
    try:
        info = pltpu.get_tpu_info()
        cap = getattr(info, "vmem_capacity_bytes", None)
        if cap:
            return int(cap)
    except Exception:
        pass
    return 128 << 20  # v5e/v6e default


def _choose_block_rows(n_rows: int, n_classes: int, itemsize: int,
                       vmem_physical: int) -> int:
    """Largest row tile (multiple of 8) whose VMEM working set fits a
    generation-aware budget: double-buffered native-dtype input tile plus
    ~2x (nt, C) f32 in-kernel intermediates (exp / one-hot select temps)."""
    if vmem_physical <= (64 << 20):   # v7x-class: 64 MiB physical VMEM
        budget = 24 << 20
    else:                             # v5e/v6e: 128 MiB physical VMEM
        budget = 64 << 20
    per_row = 2 * n_classes * itemsize + 2 * n_classes * 4
    nt = max(8, (budget // max(1, per_row)) // 8 * 8)
    # Never exceed the (rounded-up) row count.
    nt = min(nt, _round_up(n_rows, 8))
    # Keep >= ~4 grid steps so the "parallel" axis load-balances across
    # v7x's two TensorCores (no effect on v5e/v6e beyond tiny inputs).
    nt = min(nt, max(8, _round_up(_cdiv(n_rows, 4), 8)))
    return nt


@functools.partial(jax.jit, static_argnames=("block_rows",))
def avg_ce_loss(logits_stacked, targets_stacked, *, block_rows=None):
    """logits_stacked: [L, N, C] float (f32 or bf16); targets_stacked: [L, N] int -> scalar f32."""
    L, N, C = logits_stacked.shape
    R = L * N

    logits2d = logits_stacked.reshape(R, C)                 # native dtype on HBM
    targets2d = targets_stacked.reshape(R, 1).astype(jnp.int32)

    itemsize = jnp.dtype(logits2d.dtype).itemsize
    vmem_physical = _physical_vmem_bytes()
    nt = block_rows if block_rows is not None else _choose_block_rows(
        R, C, itemsize, vmem_physical)
    # No wrapper-side padding: ragged last tile is masked in-kernel.
    n_tiles = _cdiv(R, nt)

    def kernel(logits_ref, targets_ref, out_ref):
        i = pl.program_id(0)
        x = logits_ref[...]                                   # (nt, C), native dtype
        tgt = targets_ref[...]                                # (nt, 1) int32

        # Numerically stable logsumexp over classes (lanes).  Max runs in the
        # native dtype; the f32 upcast happens per-use inside the exp so no
        # full (nt, C) f32 copy is held across passes.
        m = jnp.max(x, axis=-1, keepdims=True)                # (nt, 1)
        e = jnp.exp(x.astype(jnp.float32) - m.astype(jnp.float32))
        lse = m.astype(jnp.float32) + jnp.log(
            jnp.sum(e, axis=-1, keepdims=True))

        # Gather logit at the target class via one-hot select on the native
        # tile (no dynamic gather on TPU); exact since one nonzero per row.
        # TODO(synk): no ignore_index=-100 handling (PyTorch CrossEntropyLoss
        # default); targets are assumed valid class indices per the spec.
        cls = lax.broadcasted_iota(jnp.int32, x.shape, 1)     # (nt, C)
        picked = jnp.sum(jnp.where(cls == tgt, x, jnp.zeros_like(x)),
                         axis=-1, keepdims=True).astype(jnp.float32)

        per_row = lse - picked                                # per-sample CE

        # Mask rows of the ragged last tile (and any OOB garbage) out of the sum.
        row = lax.broadcasted_iota(jnp.int32, per_row.shape, 0)
        valid = (i * nt + row) < R
        partial = jnp.sum(jnp.where(valid, per_row, 0.0))

        # Lane-dense, tile-aligned partial-sum block; wrapper reads [i, 0, 0].
        out_ref[...] = jnp.full(out_ref.shape, partial, dtype=jnp.float32)

    # VMEM accounting: double-buffered I/O tiles + f32 in-kernel working set.
    logits_tile_bytes = nt * C * itemsize
    f32_work_bytes = nt * C * 4
    targets_tile_bytes = nt * 128 * 4      # (nt, 1) int32 pads lanes to 128 in VMEM
    out_tile_bytes = 8 * 128 * 4
    vmem_limit = (2 * (logits_tile_bytes + targets_tile_bytes + out_tile_bytes)
                  + 2 * f32_work_bytes + (4 << 20))
    vmem_limit = max(vmem_limit, 32 << 20)
    vmem_limit = min(vmem_limit, int(vmem_physical * 0.9))

    partials = pl.pallas_call(
        kernel,
        out_shape=jax.ShapeDtypeStruct((n_tiles, 8, 128), jnp.float32),
        grid_spec=pltpu.PrefetchScalarGridSpec(
            num_scalar_prefetch=0,
            grid=(n_tiles,),
            in_specs=[
                pl.BlockSpec((nt, C), lambda i: (i, 0)),
                pl.BlockSpec((nt, 1), lambda i: (i, 0)),
            ],
            out_specs=pl.BlockSpec((1, 8, 128), lambda i: (i, 0, 0)),
        ),
        compiler_params=pltpu.CompilerParams(
            dimension_semantics=("parallel",),   # independent partials -> megacore-shardable
            vmem_limit_bytes=int(vmem_limit),
        ),
    )(logits2d, targets2d)

    total = jnp.sum(partials[:, 0, 0])
    return total / jnp.float32(R)


def avg_ce_loss_from_lists(logits_list, targets_list):
    """Matches the PyTorch module's list-of-tensors forward signature.
    Equal shapes -> single fused kernel launch (mean-of-means == global mean).
    Unequal batch sizes -> per-element kernel launches, then mean of the
    per-element means (exact PyTorch semantics)."""
    shapes = {tuple(l.shape) for l in logits_list}
    if len(shapes) == 1:
        logits = jnp.stack(logits_list, axis=0)
        targets = jnp.stack(targets_list, axis=0)
        return avg_ce_loss(logits, targets)
    per_elem = [avg_ce_loss(l[None], t[None])
                for l, t in zip(logits_list, targets_list)]
    return jnp.mean(jnp.stack(per_elem))


def _reference_stacked(logits_stacked, targets_stacked):
    # Pure-JAX reference matching nn.CrossEntropyLoss(reduction='none') + mean-of-means.
    logsm = jax.nn.log_softmax(logits_stacked.astype(jnp.float32), axis=-1)
    picked = jnp.take_along_axis(
        logsm, targets_stacked[..., None].astype(jnp.int32), axis=-1)[..., 0]
    return jnp.mean(jnp.mean(-picked, axis=-1))


def _reference_lists(logits_list, targets_list):
    means = []
    for l, t in zip(logits_list, targets_list):
        logsm = jax.nn.log_softmax(l.astype(jnp.float32), axis=-1)
        picked = jnp.take_along_axis(logsm, t[:, None].astype(jnp.int32), axis=-1)[:, 0]
        means.append(jnp.mean(-picked))
    return jnp.mean(jnp.stack(means))


if __name__ == "__main__":
    key = jax.random.PRNGKey(0)
    k1, k2, k3, k4, k5, k6 = jax.random.split(key, 6)

    # Config 1: list of 4 tensors, each [N=8, C=32]; bf16 (native-dtype HBM path) and f32.
    L, N, C = 4, 8, 32
    logits_f32 = jax.random.normal(k1, (L, N, C), dtype=jnp.float32)
    targets = jax.random.randint(k2, (L, N), 0, C, dtype=jnp.int32)
    logits_bf16 = logits_f32.astype(jnp.bfloat16)

    loss_bf16 = jax.block_until_ready(avg_ce_loss(logits_bf16, targets))
    ref_bf16 = _reference_stacked(logits_bf16, targets)
    assert jnp.allclose(loss_bf16, ref_bf16, rtol=1e-5, atol=1e-5), (loss_bf16, ref_bf16)

    loss_f32 = jax.block_until_ready(avg_ce_loss(logits_f32, targets))
    ref_f32 = _reference_stacked(logits_f32, targets)
    assert jnp.allclose(loss_f32, ref_f32, rtol=1e-5, atol=1e-5), (loss_f32, ref_f32)

    # List-of-tensors entry point (equal shapes -> fused path).
    loss_list = jax.block_until_ready(
        avg_ce_loss_from_lists([logits_f32[i] for i in range(L)],
                               [targets[i] for i in range(L)]))
    assert jnp.allclose(loss_list, ref_f32, rtol=1e-5, atol=1e-5), (loss_list, ref_f32)

    # Config 2: ragged last tile (L*N = 30 not a multiple of 8) -> in-kernel mask,
    # no wrapper-side padding.
    L2, N2, C2 = 3, 10, 48
    logits2 = jax.random.normal(k3, (L2, N2, C2), dtype=jnp.float32)
    targets2 = jax.random.randint(k4, (L2, N2), 0, C2, dtype=jnp.int32)
    loss2 = jax.block_until_ready(avg_ce_loss(logits2, targets2))
    ref2 = _reference_stacked(logits2, targets2)
    assert jnp.allclose(loss2, ref2, rtol=1e-5, atol=1e-5), (loss2, ref2)

    # Config 3: unequal batch sizes -> per-element fallback (true mean-of-means).
    la = jax.random.normal(k5, (6, 24), dtype=jnp.float32)
    lb = jax.random.normal(k6, (10, 24), dtype=jnp.float32)
    ta = jax.random.randint(k2, (6,), 0, 24, dtype=jnp.int32)
    tb = jax.random.randint(k4, (10,), 0, 24, dtype=jnp.int32)
    loss3 = jax.block_until_ready(avg_ce_loss_from_lists([la, lb], [ta, tb]))
    ref3 = _reference_lists([la, lb], [ta, tb])
    assert jnp.allclose(loss3, ref3, rtol=1e-5, atol=1e-5), (loss3, ref3)

    print("KERNEL_OK")
</pallas_src>

<mosaic_0001>
module attributes {stable_mosaic.version = 11 : i64} {
  func.func @kernel(%arg0: i32, %arg1: memref<8x32xbf16, #tpu.memory_space<vmem>>, %arg2: memref<8x1xi32, #tpu.memory_space<vmem>>, %arg3: memref<1x8x128xf32, #tpu.memory_space<vmem>>) attributes {dimension_semantics = [#tpu.dimension_semantics<parallel>], iteration_bounds = array<i64: 4>, scalar_prefetch = 0 : i64, scratch_operands = 0 : i64, tpu.core_type = #tpu.core_type<tc>, window_params = [{transform_indices = @transform_0, window_bounds = array<i64: 8, 32>}, {transform_indices = @transform_1, window_bounds = array<i64: 8, 1>}, {transform_indices = @transform_2, window_bounds = array<i64: 1, 8, 128>}]} {
    %c0 = arith.constant 0 : index
    %c0_0 = arith.constant 0 : index
    %0 = vector.load %arg1[%c0, %c0_0] : memref<8x32xbf16, #tpu.memory_space<vmem>>, vector<8x32xbf16>
    %c0_1 = arith.constant 0 : index
    %c0_2 = arith.constant 0 : index
    %1 = vector.load %arg2[%c0_1, %c0_2] : memref<8x1xi32, #tpu.memory_space<vmem>>, vector<8x1xi32>
    %cst = arith.constant dense<0xFF80> : vector<8xbf16>
    %2 = vector.multi_reduction <maximumf>, %0, %cst [1] : vector<8x32xbf16> to vector<8xbf16>
    %3 = vector.shape_cast %2 : vector<8xbf16> to vector<8x1xbf16>
    %4 = arith.extf %0 : vector<8x32xbf16> to vector<8x32xf32>
    %5 = arith.extf %3 : vector<8x1xbf16> to vector<8x1xf32>
    %6 = vector.broadcast %5 : vector<8x1xf32> to vector<8x32xf32>
    %7 = arith.subf %4, %6 : vector<8x32xf32>
    %8 = math.exp %7 : vector<8x32xf32>
    %9 = arith.extf %3 : vector<8x1xbf16> to vector<8x1xf32>
    %cst_3 = arith.constant dense<0.000000e+00> : vector<8xf32>
    %10 = vector.multi_reduction <add>, %8, %cst_3 [1] : vector<8x32xf32> to vector<8xf32>
    %11 = vector.shape_cast %10 : vector<8xf32> to vector<8x1xf32>
    %12 = math.log %11 : vector<8x1xf32>
    %13 = arith.addf %9, %12 : vector<8x1xf32>
    %14 = tpu.iota {dimensions = array<i32: 1>} : vector<8x32xi32>
    %15 = vector.broadcast %1 : vector<8x1xi32> to vector<8x32xi32>
    %16 = arith.cmpi eq, %14, %15 : vector<8x32xi32>
    %cst_4 = arith.constant 0.000000e+00 : bf16
    %17 = vector.broadcast %cst_4 : bf16 to vector<8x32xbf16>
    %18 = arith.select %16, %0, %17 : vector<8x32xi1>, vector<8x32xbf16>
    %19 = arith.extf %18 : vector<8x32xbf16> to vector<8x32xf32>
    %cst_5 = arith.constant dense<0.000000e+00> : vector<8xf32>
    %20 = vector.multi_reduction <add>, %19, %cst_5 [1] : vector<8x32xf32> to vector<8xf32>
    %21 = vector.shape_cast %20 : vector<8xf32> to vector<8x1xf32>
    %22 = arith.truncf %21 : vector<8x1xf32> to vector<8x1xbf16>
    %23 = arith.extf %22 : vector<8x1xbf16> to vector<8x1xf32>
    %24 = arith.subf %13, %23 : vector<8x1xf32>
    %25 = tpu.iota {dimensions = array<i32: 0>} : vector<8x1xi32>
    %c8_i32 = arith.constant 8 : i32
    %26 = arith.muli %arg0, %c8_i32 : i32
    %27 = vector.broadcast %26 : i32 to vector<8x1xi32>
    %28 = arith.addi %27, %25 : vector<8x1xi32>
    %c32_i32 = arith.constant 32 : i32
    %29 = vector.broadcast %c32_i32 : i32 to vector<8x1xi32>
    %30 = arith.cmpi slt, %28, %29 : vector<8x1xi32>
    %cst_6 = arith.constant 0.000000e+00 : f32
    %31 = vector.broadcast %cst_6 : f32 to vector<8x1xf32>
    %32 = arith.select %30, %24, %31 : vector<8x1xi1>, vector<8x1xf32>
    %33 = vector.shape_cast %32 : vector<8x1xf32> to vector<1x8x1xf32>
    %cst_7 = arith.constant dense<0.000000e+00> : vector<1xf32>
    %34 = vector.multi_reduction <add>, %33, %cst_7 [1, 2] : vector<1x8x1xf32> to vector<1xf32>
    %35 = vector.shape_cast %34 : vector<1xf32> to vector<1x1x1xf32>
    %36 = vector.extract %35[0, 0, 0] : f32 from vector<1x1x1xf32>
    %37 = vector.broadcast %36 : f32 to vector<1x8x128xf32>
    %c0_8 = arith.constant 0 : index
    %c0_9 = arith.constant 0 : index
    %c0_10 = arith.constant 0 : index
    %38 = vector.load %arg3[%c0_8, %c0_9, %c0_10] : memref<1x8x128xf32, #tpu.memory_space<vmem>>, vector<1x8x128xf32>
    tpu.vector_store %arg3[%c0_8, %c0_9, %c0_10], %37 {strides = array<i32>} : memref<1x8x128xf32, #tpu.memory_space<vmem>>, vector<1x8x128xf32>,
    return
  }
  func.func @transform_0(%arg0: i32) -> (i32, i32) {
    %c0_i32 = arith.constant 0 : i32
    %c0_i32_0 = arith.constant 0 : i32
    return %arg0, %c0_i32 : i32, i32
  }
  func.func @transform_1(%arg0: i32) -> (i32, i32) {
    %c0_i32 = arith.constant 0 : i32
    %c0_i32_0 = arith.constant 0 : i32
    return %arg0, %c0_i32 : i32, i32
  }
  func.func @transform_2(%arg0: i32) -> (i32, i32, i32) {
    %c0_i32 = arith.constant 0 : i32
    %c0_i32_0 = arith.constant 0 : i32
    %c0_i32_1 = arith.constant 0 : i32
    return %arg0, %c0_i32, %c0_i32_0 : i32, i32, i32
  }
}

</mosaic_0001>

<llo_original>
// kernel: avg_ce_loss.1
$region0: #{avg_ce_loss.1}
  #allocation0 [shape = 'u32[]', space=smem, size = 0x4, offset = 0x4, fixed_abs, tag = 'smem constant byte address 0x4 - core index']
  #allocation1 [shape = 'u32[72,128]{1,0:T(1,128)}', space=vmem, size = 0x9000, scoped, tag = 'internal scratch']
  %s0 = inlined_call_operand.vmem [shape: bf16[32,32], index: 0, kind: input, shape index: {}]
  %s1 = inlined_call_operand.vmem [shape: s32[32,1], index: 1, kind: input, shape index: {}]
  %s2 = inlined_call_operand.vmem [shape: f32[4,8,128], index: 2, kind: output, shape index: {}]
  %s3 = sld [smem:[#allocation0]]
  $region41: #{avg_ce_loss.1} parent=0
    _
  %s5 = ssub.s32 1, %s3
  %s6 = scalar_select 0, %s5, %s3
  loop: start=0, step=1, limit=6
  $region2: #{avg_ce_loss.1} parent=0 // loop_pre_header
    _
  $region3: #{avg_ce_loss.1} parent=0 // loop_header
    %s8 = sphi 0, %s12
    %p9 = scmp.ge.s32.totalorder %s8, 6
    %s18 = sphi 0, %s20
    %s21 = sphi 0, %s18
    %s22 = sphi 0, %s21
    %s38 = sphi 0, %s22
    %s44 = sphi 0, %s46
    %s47 = sphi 0, %s44
    %s48 = sphi 0, %s47
    %s64 = sphi 0, %s48
    %s70 = sphi 0, %s72
    %s73 = sphi 0, %s70
    %s74 = sphi 0, %s73
    %s90 = sphi 0, %s74
  $region4: #{avg_ce_loss.1} parent=0 // loop_header_branch
    %11 = sbr.rel (%p9) target = $region8
  $region5: #{avg_ce_loss.1} parent=0 // loop_body
    %s13 = ssub.s32 %s8, 1
    %s14 = ssub.s32 %s8, 2
    %s15 = sadd.s32 %s8, 1
    %s16 = ssub.s32 %s8, %s15
    %p17 = scmp.eq.s32.totalorder %s16, 0
    %s19 = sadd.s32 %s18, 1
    %s20 = scalar_select %p17, %s18, %s19
    %p23 = pneg %p17
    %p24 = scmp.eq.s32.totalorder %s8, 3
    %p25 = por %p23, %p24
    %p26 = scmp.ne.s32.totalorder %s18, %s21
    %p27 = scmp.eq.s32.totalorder %s8, 0
    %p28 = por %p26, %p27
    %p29 = scmp.ne.s32.totalorder %s18, %s21
    %p30 = scmp.eq.s32.totalorder %s13, 3
    %p31 = por %p29, %p30
    %p32 = scmp.ne.s32.totalorder %s21, %s22
    %p33 = scmp.eq.s32.totalorder %s13, 0
    %p34 = por %p32, %p33
    %p35 = scmp.ne.s32.totalorder %s21, %s22
    %p36 = scmp.eq.s32.totalorder %s14, 3
    %p37 = por %p35, %p36
    %p39 = scmp.ne.s32.totalorder %s22, %s38
    %p40 = scmp.eq.s32.totalorder %s14, 0
    %p41 = por %p39, %p40
    %s42 = ssub.s32 %s8, %s15
    %p43 = scmp.eq.s32.totalorder %s42, 0
    %s45 = sadd.s32 %s44, 1
    %s46 = scalar_select %p43, %s44, %s45
    %p49 = pneg %p43
    %p50 = scmp.eq.s32.totalorder %s8, 3
    %p51 = por %p49, %p50
    %p52 = scmp.ne.s32.totalorder %s44, %s47
    %p53 = scmp.eq.s32.totalorder %s8, 0
    %p54 = por %p52, %p53
    %p55 = scmp.ne.s32.totalorder %s44, %s47
    %p56 = scmp.eq.s32.totalorder %s13, 3
    %p57 = por %p55, %p56
    %p58 = scmp.ne.s32.totalorder %s47, %s48
    %p59 = scmp.eq.s32.totalorder %s13, 0
    %p60 = por %p58, %p59
    %p61 = scmp.ne.s32.totalorder %s47, %s48
    %p62 = scmp.eq.s32.totalorder %s14, 3
    %p63 = por %p61, %p62
    %p65 = scmp.ne.s32.totalorder %s48, %s64
    %p66 = scmp.eq.s32.totalorder %s14, 0
    %p67 = por %p65, %p66
    %s68 = ssub.s32 %s8, %s15
    %p69 = scmp.eq.s32.totalorder %s68, 0
    %s71 = sadd.s32 %s70, 1
    %s72 = scalar_select %p69, %s70, %s71
    %p75 = pneg %p69
    %p76 = scmp.eq.s32.totalorder %s8, 3
    %p77 = por %p75, %p76
    %p78 = scmp.ne.s32.totalorder %s70, %s73
    %p79 = scmp.eq.s32.totalorder %s8, 0
    %p80 = por %p78, %p79
    %p81 = scmp.ne.s32.totalorder %s70, %s73
    %p82 = scmp.eq.s32.totalorder %s13, 3
    %p83 = por %p81, %p82
    %p84 = scmp.ne.s32.totalorder %s73, %s74
    %p85 = scmp.eq.s32.totalorder %s13, 0
    %p86 = por %p84, %p85
    %p87 = scmp.ne.s32.totalorder %s73, %s74
    %p88 = scmp.eq.s32.totalorder %s14, 3
    %p89 = por %p87, %p88
    %p91 = scmp.ne.s32.totalorder %s74, %s90
    %p92 = scmp.eq.s32.totalorder %s14, 0
    %p93 = por %p91, %p92
    %p94 = scmp.le.s32.totalorder 1, %s8
    %p95 = scmp.lt.s32.totalorder %s8, 5
    %p96 = pnand %p94, %p95
    %p97 = pneg %p96
    // Predicated region
    $region9: #{avg_ce_loss.1} parent=5 // pred_check
      _
    $region10: #{avg_ce_loss.1} parent=5 // pred_check_branch
      %99 = sbr.rel (%p96) target = $region12
    $region11: #{avg_ce_loss.1} parent=5 // pred_region
      %s100 = ssub.s32 %s8, 1
    $region12: #{avg_ce_loss.1} parent=5 // pred_fallthru
      _
    %p101 = scmp.lt.s32.totalorder %s8, 4
    // Predicated region
    $region13: #{avg_ce_loss.1} parent=5 // pred_check
      %p102 = pneg %p101
    $region14: #{avg_ce_loss.1} parent=5 // pred_check_branch
      %104 = sbr.rel (%p102) target = $region16
    $region15: #{avg_ce_loss.1} parent=5 // pred_region
      // Predicated region
      $region17: #{avg_ce_loss.1} parent=15 // pred_check
        %p105 = pneg %p28
      $region18: #{avg_ce_loss.1} parent=15 // pred_check_branch
        %107 = sbr.rel (%p105) target = $region20
      $region19: #{avg_ce_loss.1} parent=15 // pred_region
        %p108 = scmp.lt.s32.totalorder %s8, 3
        %s109 = scalar_select %p108, %s8, 3
        %s110 = smul.addr %s109, 4
        %s111 = scalar_lea.vmem %s0, %s110
      $region20: #{avg_ce_loss.1} parent=15 // pred_fallthru
        _
      // Predicated region
      $region21: #{avg_ce_loss.1} parent=15 // pred_check
        %p112 = pneg %p54
      $region22: #{avg_ce_loss.1} parent=15 // pred_check_branch
        %114 = sbr.rel (%p112) target = $region24
      $region23: #{avg_ce_loss.1} parent=15 // pred_region
        %p115 = scmp.lt.s32.totalorder %s8, 3
        %s116 = scalar_select %p115, %s8, 3
        %s117 = smul.addr %s116, 8
        %s118 = scalar_lea.vmem %s1, %s117
      $region24: #{avg_ce_loss.1} parent=15 // pred_fallthru
        _
    $region16: #{avg_ce_loss.1} parent=5 // pred_fallthru
      _
    %p119 = scmp.le.s32.totalorder 1, %s8
    %p120 = scmp.lt.s32.totalorder %s8, 5
    %p121 = pnand %p119, %p120
    %p122 = pneg %p121
    // Predicated region
    $region25: #{avg_ce_loss.1} parent=5 // pred_check
      _
    $region26: #{avg_ce_loss.1} parent=5 // pred_check_branch
      %124 = sbr.rel (%p121) target = $region28
    $region27: #{avg_ce_loss.1} parent=5 // pred_region
      %s125 = ssub.s32 %s8, 1
      %p126 = scmp.lt.s32.totalorder %s13, 3
      %s127 = scalar_select %p126, %s13, 3
      %s128 = smul.addr %s127, 4
      %s129 = scalar_lea.vmem %s0, %s128
      %p130 = pneg %p34
      %p131 = pneg %p31
      %p132 = scmp.lt.s32.totalorder %s13, 3
      %s133 = scalar_select %p132, %s13, 3
      %s134 = smul.addr %s133, 8
      %s135 = scalar_lea.vmem %s1, %s134
      %p136 = pneg %p60
      %p137 = pneg %p57
      %p138 = pneg %p86
      %p139 = pneg %p83
      %p140 = scmp.lt.s32.totalorder %s13, 3
      %s141 = scalar_select %p140, %s13, 3
      %s142 = smul.addr %s141, 8
      %s143 = scalar_lea.vmem %s2, %s142
      %p144 = scmp.lt.s32.totalorder %s13, 3
      %s145 = scalar_select %p144, %s13, 3
      %s146 = smul.addr %s145, 4
      %s147 = scalar_lea.vmem %s0, %s146
      %p148 = scmp.lt.s32.totalorder %s13, 3
      %s149 = scalar_select %p148, %s13, 3
      %s150 = smul.addr %s149, 8
      %s151 = scalar_lea.vmem %s1, %s150
      %p152 = scmp.lt.s32.totalorder %s13, 3
      %s153 = scalar_select %p152, %s13, 3
      %s154 = smul.addr %s153, 8
      %s155 = scalar_lea.vmem %s2, %s154
      %v157 = vld [vmem:[%s147] sm:$0xf]
      %v158 = vld [vmem:[%s151] sm:$0xff]
      %v159 = vunpack.c.l.bf16 %v157
      %vm160 = vcmask 261120
      %v161 = vsel %vm160, %v159, -inf
      %162 = vmax.xlane.f32.xlu0 %v161
      %v163 = vpop.xlane.xlu0 %162
      %v164 = vpack.c.bf16 %v163, %v163
      %v165 = vunpack.c.l.bf16 %v164
      %v166 = vsub.f32 %v159, %v165
      %v167 = vmul.f32 %v166, 1.442695
      %v168 = vpow.pop %v167
      %v169 = vsel %vm160, %v168, 0.0
      %170 = vadd.xlane.f32.xlu0 %v169
      %v171 = vpop.xlane.xlu0 %170
      %v172 = vlog2.pop %v171
      %v173 = vmul.f32 %v172, 0.6931472
      %v174 = vadd.f32 %v165, %v173
      %v175 = vlaneseq
      %v176 = vand.u32 %v175, 127
      %177 = vset.pattern.permute.xlu0 0
      %178 = vperm.xlu0 %177, %v158
      %v179 = vpop.permute.xlu0 %178
      %vm180 = vcmp.eq.s32.totalorder %v176, %v179
      %vm181 = vmpackc.low %vm180, %vm180
      %v182 = vsel %vm181, %v157, 0
      %v183 = vunpack.c.l.bf16 %v182
      %v184 = vsel %vm160, %v183, 0.0
      %185 = vadd.xlane.f32.xlu0 %v184
      %v186 = vpop.xlane.xlu0 %185
      %v187 = vpack.c.bf16 %v186, %v186
      %v188 = vunpack.c.l.bf16 %v187
      %v189 = vsub.f32 %v174, %v188
      %v190 = vlaneseq
      %v191 = vshrl.u32 %v190, 7
      %s192 = smul.u32 %s13, 8
      %v193 = vstv %s192
      %v194 = vadd.s32 %v193, %v191
      %vm195 = vcmp.lt.s32.totalorder %v194, 32
      %v196 = vsel %vm195, %v189, 0.0
      %vm197 = vcmask 7168
      %v198 = vsel %vm197, %v196, 0.0
      %199 = vadd.xlane.f32.xlu0 %v198
      %v200 = vpop.xlane.xlu0 %199
      %v201 = vrot.slane %v200, 4
      %v202 = vadd.f32 %v200, %v201
      %v203 = vrot.slane %v202, 2
      %v204 = vadd.f32 %v202, %v203
      %v205 = vrot.slane %v204, 1
      %v206 = vadd.f32 %v204, %v205
      %s207 = vtos %v206
      %v208 = vstv %s207
      %209 = vst [vmem:[%s155] sm:$0xff] %v208
      %p210 = scmp.lt.s32.totalorder %s13, 3
      %s211 = scalar_select %p210, %s13, 3
      %s212 = smul.addr %s211, 8
      %s213 = scalar_lea.vmem %s2, %s212
      // Predicated region
      $region29: #{avg_ce_loss.1} parent=27 // pred_check
        %p214 = pneg %p83
      $region30: #{avg_ce_loss.1} parent=27 // pred_check_branch
        %216 = sbr.rel (%p214) target = $region32
      $region31: #{avg_ce_loss.1} parent=27 // pred_region
        _
      $region32: #{avg_ce_loss.1} parent=27 // pred_fallthru
        _
    $region28: #{avg_ce_loss.1} parent=5 // pred_fallthru
      _
    %p217 = scmp.le.s32.totalorder 2, %s8
    // Predicated region
    $region33: #{avg_ce_loss.1} parent=5 // pred_check
      %p218 = pneg %p217
    $region34: #{avg_ce_loss.1} parent=5 // pred_check_branch
      %220 = sbr.rel (%p218) target = $region36
    $region35: #{avg_ce_loss.1} parent=5 // pred_region
      %s221 = ssub.s32 %s8, 2
      // Predicated region
      $region37: #{avg_ce_loss.1} parent=35 // pred_check
        %p222 = pneg %p89
      $region38: #{avg_ce_loss.1} parent=35 // pred_check_branch
        %224 = sbr.rel (%p222) target = $region40
      $region39: #{avg_ce_loss.1} parent=35 // pred_region
        %p225 = scmp.lt.s32.totalorder %s14, 3
        %s226 = scalar_select %p225, %s14, 3
        %s227 = smul.addr %s226, 8
        %s228 = scalar_lea.vmem %s2, %s227
      $region40: #{avg_ce_loss.1} parent=35 // pred_fallthru
        _
    $region36: #{avg_ce_loss.1} parent=5 // pred_fallthru
      _
  $region6: #{avg_ce_loss.1} parent=0 // loop_footer
    %s12 = sadd.s32 1, %s8
  $region7: #{avg_ce_loss.1} parent=0 // loop_footer_branch
    %7 = sbr.rel target = $region3
  $region8: #{avg_ce_loss.1} parent=0 // loop_exit
    _

</llo_original>
